<compile_context>
chip_gen: v5e
topology: v5e:2x2
jax: 0.10.0
libtpu: 0.0.40
codegen_flags: <defaults>
</compile_context>

<pallas_src>
import functools

import jax
import jax.numpy as jnp
from jax.experimental import pallas as pl
from jax.experimental.pallas import tpu as pltpu

EMBED_DIMENSION = 300
EMBED_MAX_NORM = 1.0
_SUBLANE = 16  # bf16 sublane packing; 16 is also a multiple of the f32 tile (8)


def _round_up(n: int, m: int) -> int:
    return (n + m - 1) // m * m


def skipgram_logits_kernel(x_ref, wt_ref, b_ref, out_ref):
    """One grid step computes one (B, TV) tile of the logits.

    x_ref   : VMEM (B, Dp)   bf16 -- renormed embeddings, resident across grid
    wt_ref  : VMEM (Dp, TV)  bf16 -- lane-dense tile of W^T (streamed)
    b_ref   : VMEM (1, TV)   f32  -- bias tile for this vocab slice (streamed)
    out_ref : VMEM (B, TV)   f32  -- logits tile
    """
    out_ref[...] = (
        jnp.dot(x_ref[...], wt_ref[...], preferred_element_type=jnp.float32)
        + b_ref[...]
    )


def prepare_linear_params(w, b, compute_dtype=jnp.bfloat16):
    """One-time (parameter-load-time) prep of the Linear layer.

    w (V, D) f32, b (V,) f32  ->  wt (Dp, V) bf16 lane-dense, bias (1, V) f32.
    Done OUTSIDE the per-forward jit so the transpose/cast/pad is not repeated.
    """
    w = jnp.asarray(w, jnp.float32)
    V, D = w.shape
    d_pad = _round_up(D, _SUBLANE)
    wt = jnp.pad(w.T, ((0, d_pad - D), (0, 0))).astype(compute_dtype)   # (Dp, V)
    bias2d = jnp.asarray(b, jnp.float32).reshape(1, V)                  # (1, V)
    return wt, bias2d


@functools.partial(jax.jit, static_argnames=("tv",))
def skipgram_forward(ids, emb, wt, bias2d, *, tv=2048):
    """ids (B,) int32, emb (V, D) f32, wt (Dp, V) bf16, bias2d (1, V) f32 -> (B, V) f32."""
    B = ids.shape[0]
    V, D = emb.shape
    d_pad = wt.shape[0]
    assert wt.shape == (d_pad, V) and bias2d.shape == (1, V)

    # ---- Embedding(max_norm=1): gather B rows, clip each to unit L2 norm.
    # Only B*D elements of the table are touched, so this stays in plain JAX
    # and the table is never staged into VMEM.
    rows = jnp.take(emb, ids, axis=0)                                   # (B, D)
    nrm = jnp.sqrt(jnp.sum(rows * rows, axis=-1, keepdims=True))
    scale = jnp.where(nrm > EMBED_MAX_NORM,
                      EMBED_MAX_NORM / (nrm + 1e-7),
                      jnp.float32(1.0))
    x = rows * scale                                                    # (B, D) f32
    x = jnp.pad(x, ((0, 0), (0, d_pad - D))).astype(wt.dtype)           # (B, Dp) bf16
    # TODO(synk): torch.nn.Embedding(max_norm=...) also rewrites the stored
    # weight rows in place (training-time side effect); single-forward logits
    # are identical, so that mutation is not replicated here.

    # ---- Linear(D, V): stream lane-dense (Dp, tv) W^T tiles over the MXU.
    tv = min(tv, V)
    assert V % tv == 0, "vocab must be divisible by the vocab tile"
    grid = (V // tv,)

    return pl.pallas_call(
        skipgram_logits_kernel,
        out_shape=jax.ShapeDtypeStruct((B, V), jnp.float32),
        grid_spec=pltpu.PrefetchScalarGridSpec(
            num_scalar_prefetch=0,
            grid=grid,
            in_specs=[
                pl.BlockSpec((B, d_pad), lambda j: (0, 0)),   # x: resident
                pl.BlockSpec((d_pad, tv), lambda j: (0, j)),  # W^T tile (streamed)
                pl.BlockSpec((1, tv), lambda j: (0, j)),      # bias tile (streamed)
            ],
            out_specs=pl.BlockSpec((B, tv), lambda j: (0, j)),
        ),
        compiler_params=pltpu.CompilerParams(
            dimension_semantics=("parallel",),     # vocab tiles independent
            vmem_limit_bytes=32 * 1024 * 1024,     # well within v5e/v6e/v7x budgets
        ),
    )(x, wt, bias2d)


if __name__ == "__main__":
    VOCAB = 1024   # small synthetic vocab, multiple of 128 (single-tile demo)
    B = 8          # batch of token ids

    key = jax.random.PRNGKey(0)
    k1, k2, k3, k4 = jax.random.split(key, 4)

    # Deterministic synthetic parameters (shapes from module __init__):
    #   nn.Embedding(VOCAB, 300)  -> N(0, 1)
    #   nn.Linear(300, VOCAB)     -> U(-1/sqrt(300), 1/sqrt(300))
    emb = jax.random.normal(k1, (VOCAB, EMBED_DIMENSION), jnp.float32)
    bound = 1.0 / (EMBED_DIMENSION ** 0.5)
    w = jax.random.uniform(k2, (VOCAB, EMBED_DIMENSION), jnp.float32,
                           minval=-bound, maxval=bound)
    b = jax.random.uniform(k3, (VOCAB,), jnp.float32,
                           minval=-bound, maxval=bound)
    ids = jax.random.randint(k4, (B,), 0, VOCAB, dtype=jnp.int32)

    # One-time parameter prep (outside the per-forward jitted path).
    wt, bias2d = prepare_linear_params(w, b)

    out = jax.block_until_ready(skipgram_forward(ids, emb, wt, bias2d))

    # Pure-JAX f32 reference for sanity (bf16 weight stream -> ~1e-3 rel diff).
    rows = emb[ids]
    nrm = jnp.sqrt(jnp.sum(rows * rows, axis=-1, keepdims=True))
    scale = jnp.where(nrm > EMBED_MAX_NORM, EMBED_MAX_NORM / (nrm + 1e-7), 1.0)
    ref = (rows * scale) @ w.T + b

    assert out.shape == (B, VOCAB)
    assert bool(jnp.allclose(out, ref, atol=2e-2, rtol=2e-2))
    print("KERNEL_OK")
</pallas_src>

<mosaic_0001>
module attributes {stable_mosaic.version = 11 : i64} {
  func.func @skipgram_logits_kernel(%arg0: i32, %arg1: memref<8x304xbf16, #tpu.memory_space<vmem>>, %arg2: memref<304x1024xbf16, #tpu.memory_space<vmem>>, %arg3: memref<1x1024xf32, #tpu.memory_space<vmem>>, %arg4: memref<8x1024xf32, #tpu.memory_space<vmem>>) attributes {dimension_semantics = [#tpu.dimension_semantics<parallel>], iteration_bounds = array<i64: 1>, scalar_prefetch = 0 : i64, scratch_operands = 0 : i64, tpu.core_type = #tpu.core_type<tc>, window_params = [{pipeline_mode = #tpu.pipeline_mode<synchronous>, transform_indices = @transform_0, window_bounds = array<i64: 8, 304>}, {transform_indices = @transform_1, window_bounds = array<i64: 304, 1024>}, {transform_indices = @transform_2, window_bounds = array<i64: 1, 1024>}, {transform_indices = @transform_3, window_bounds = array<i64: 8, 1024>}]} {
    %c0 = arith.constant 0 : index
    %c0_0 = arith.constant 0 : index
    %0 = vector.load %arg1[%c0, %c0_0] : memref<8x304xbf16, #tpu.memory_space<vmem>>, vector<8x304xbf16>
    %c0_1 = arith.constant 0 : index
    %c0_2 = arith.constant 0 : index
    %1 = vector.load %arg2[%c0_1, %c0_2] : memref<304x1024xbf16, #tpu.memory_space<vmem>>, vector<304x1024xbf16>
    %cst = arith.constant dense<0.000000e+00> : vector<8x1024xf32>
    %2 = tpu.matmul %0, %1, %cst {dimension_numbers = #tpu.dot_dimension_numbers<[1], [0], [0], [1], [0, 0, 1, 1], [], []>} : vector<8x304xbf16>, vector<304x1024xbf16>, vector<8x1024xf32> -> vector<8x1024xf32>
    %c0_3 = arith.constant 0 : index
    %c0_4 = arith.constant 0 : index
    %3 = vector.load %arg3[%c0_3, %c0_4] : memref<1x1024xf32, #tpu.memory_space<vmem>>, vector<1x1024xf32>
    %4 = vector.broadcast %3 : vector<1x1024xf32> to vector<8x1024xf32>
    %5 = arith.addf %2, %4 : vector<8x1024xf32>
    %c0_5 = arith.constant 0 : index
    %c0_6 = arith.constant 0 : index
    %6 = vector.load %arg4[%c0_5, %c0_6] : memref<8x1024xf32, #tpu.memory_space<vmem>>, vector<8x1024xf32>
    tpu.vector_store %arg4[%c0_5, %c0_6], %5 {strides = array<i32>} : memref<8x1024xf32, #tpu.memory_space<vmem>>, vector<8x1024xf32>,
    return
  }
  func.func @transform_0(%arg0: i32) -> (i32, i32) {
    %c0_i32 = arith.constant 0 : i32
    %c0_i32_0 = arith.constant 0 : i32
    %c0_i32_1 = arith.constant 0 : i32
    return %c0_i32, %c0_i32_0 : i32, i32
  }
  func.func @transform_1(%arg0: i32) -> (i32, i32) {
    %c0_i32 = arith.constant 0 : i32
    %c0_i32_0 = arith.constant 0 : i32
    return %c0_i32, %arg0 : i32, i32
  }
  func.func @transform_2(%arg0: i32) -> (i32, i32) {
    %c0_i32 = arith.constant 0 : i32
    %c0_i32_0 = arith.constant 0 : i32
    return %c0_i32, %arg0 : i32, i32
  }
  func.func @transform_3(%arg0: i32) -> (i32, i32) {
    %c0_i32 = arith.constant 0 : i32
    %c0_i32_0 = arith.constant 0 : i32
    return %c0_i32, %arg0 : i32, i32
  }
}

</mosaic_0001>

<llo_original>
// kernel: skipgram_forward.1
$region0: #{skipgram_forward.1}
  #allocation0 [shape = 'u32[]', space=smem, size = 0x4, offset = 0x4, fixed_abs, tag = 'smem constant byte address 0x4 - core index']
  #allocation1 [shape = 'u32[72,128]{1,0:T(1,128)}', space=vmem, size = 0x9000, scoped, tag = 'internal scratch']
  %s0 = inlined_call_operand.vmem [shape: bf16[8,304], index: 0, kind: input, shape index: {}]
  %s1 = inlined_call_operand.vmem [shape: bf16[304,1024], index: 1, kind: input, shape index: {}]
  %s2 = inlined_call_operand.vmem [shape: f32[1,1024], index: 2, kind: input, shape index: {}]
  %s3 = inlined_call_operand.hbm [shape: f32[8,1024], index: 3, kind: output, shape index: {}]
  %s4 = sld [smem:[#allocation0]]
  $region22: #{skipgram_forward.1} parent=0
    _
  %s6 = ssub.s32 1, %s4
  %s7 = scalar_select 0, %s6, %s4
  $region1: #{skipgram_forward.1} parent=0
    #allocation2 [shape = 'u8[32768]{0}', space=vmem, size = 0x8000, scoped, tag = 'output window, operand 0, single buffered']
    #allocation3 [shape = 's32[1]{0}', space=sflag, size = 0x4, scoped, tag = 'scoped memory for skipgram_forward.1']
    %8 = vsyncpa [#allocation3], 0
    // Predicated region
    $region2: #{skipgram_forward.1} parent=1 // pred_check
      _
    $region3: #{skipgram_forward.1} parent=1 // pred_check_branch
      %10 = sbr.rel (0) target = $region5
    $region4: #{skipgram_forward.1} parent=1 // pred_region
      _
    $region5: #{skipgram_forward.1} parent=1 // pred_fallthru
      _
    // Predicated region
    $region6: #{skipgram_forward.1} parent=1 // pred_check
      _
    $region7: #{skipgram_forward.1} parent=1 // pred_check_branch
      %12 = sbr.rel (0) target = $region9
    $region8: #{skipgram_forward.1} parent=1 // pred_region
      _
    $region9: #{skipgram_forward.1} parent=1 // pred_fallthru
      _
    // Predicated region
    $region10: #{skipgram_forward.1} parent=1 // pred_check
      _
    $region11: #{skipgram_forward.1} parent=1 // pred_check_branch
      %14 = sbr.rel (0) target = $region13
    $region12: #{skipgram_forward.1} parent=1 // pred_region
      _
    $region13: #{skipgram_forward.1} parent=1 // pred_fallthru
      _
    %v16 = vld [vmem:[%s0] sm:$0xff]
    %v17 = vld [vmem:[%s0 + $0x8] sm:$0xf]
    %v18 = vld [vmem:[%s1] sm:$0xff]
    %v19 = vld [vmem:[%s1 + $0x8] sm:$0xff]
    %v20 = vld [vmem:[%s1 + $0x10] sm:$0xff]
    %v21 = vld [vmem:[%s1 + $0x18] sm:$0xff]
    %v22 = vld [vmem:[%s1 + $0x20] sm:$0xff]
    %v23 = vld [vmem:[%s1 + $0x28] sm:$0xff]
    %v24 = vld [vmem:[%s1 + $0x30] sm:$0xff]
    %v25 = vld [vmem:[%s1 + $0x38] sm:$0xff]
    %v26 = vld [vmem:[%s1 + $0x40] sm:$0xff]
    %v27 = vld [vmem:[%s1 + $0x48] sm:$0xff]
    %v28 = vld [vmem:[%s1 + $0x50] sm:$0xff]
    %v29 = vld [vmem:[%s1 + $0x58] sm:$0xff]
    %v30 = vld [vmem:[%s1 + $0x60] sm:$0xff]
    %v31 = vld [vmem:[%s1 + $0x68] sm:$0xff]
    %v32 = vld [vmem:[%s1 + $0x70] sm:$0xff]
    %v33 = vld [vmem:[%s1 + $0x78] sm:$0xff]
    %v34 = vld [vmem:[%s1 + $0x80] sm:$0xff]
    %v35 = vld [vmem:[%s1 + $0x88] sm:$0xff]
    %v36 = vld [vmem:[%s1 + $0x90] sm:$0xff]
    %v37 = vld [vmem:[%s1 + $0x98] sm:$0xff]
    %v38 = vld [vmem:[%s1 + $0xa0] sm:$0xff]
    %v39 = vld [vmem:[%s1 + $0xa8] sm:$0xff]
    %v40 = vld [vmem:[%s1 + $0xb0] sm:$0xff]
    %v41 = vld [vmem:[%s1 + $0xb8] sm:$0xff]
    %v42 = vld [vmem:[%s1 + $0xc0] sm:$0xff]
    %v43 = vld [vmem:[%s1 + $0xc8] sm:$0xff]
    %v44 = vld [vmem:[%s1 + $0xd0] sm:$0xff]
    %v45 = vld [vmem:[%s1 + $0xd8] sm:$0xff]
    %v46 = vld [vmem:[%s1 + $0xe0] sm:$0xff]
    %v47 = vld [vmem:[%s1 + $0xe8] sm:$0xff]
    %v48 = vld [vmem:[%s1 + $0xf0] sm:$0xff]
    %v49 = vld [vmem:[%s1 + $0xf8] sm:$0xff]
    %v50 = vld [vmem:[%s1 + $0x100] sm:$0xff]
    %v51 = vld [vmem:[%s1 + $0x108] sm:$0xff]
    %v52 = vld [vmem:[%s1 + $0x110] sm:$0xff]
    %v53 = vld [vmem:[%s1 + $0x118] sm:$0xff]
    %v54 = vld [vmem:[%s1 + $0x120] sm:$0xff]
    %v55 = vld [vmem:[%s1 + $0x128] sm:$0xff]
    %v56 = vld [vmem:[%s1 + $0x130] sm:$0xff]
    %v57 = vld [vmem:[%s1 + $0x138] sm:$0xff]
    %v58 = vld [vmem:[%s1 + $0x140] sm:$0xff]
    %v59 = vld [vmem:[%s1 + $0x148] sm:$0xff]
    %v60 = vld [vmem:[%s1 + $0x150] sm:$0xff]
    %v61 = vld [vmem:[%s1 + $0x158] sm:$0xff]
    %v62 = vld [vmem:[%s1 + $0x160] sm:$0xff]
    %v63 = vld [vmem:[%s1 + $0x168] sm:$0xff]
    %v64 = vld [vmem:[%s1 + $0x170] sm:$0xff]
    %v65 = vld [vmem:[%s1 + $0x178] sm:$0xff]
    %v66 = vld [vmem:[%s1 + $0x180] sm:$0xff]
    %v67 = vld [vmem:[%s1 + $0x188] sm:$0xff]
    %v68 = vld [vmem:[%s1 + $0x190] sm:$0xff]
    %v69 = vld [vmem:[%s1 + $0x198] sm:$0xff]
    %v70 = vld [vmem:[%s1 + $0x1a0] sm:$0xff]
    %v71 = vld [vmem:[%s1 + $0x1a8] sm:$0xff]
    %v72 = vld [vmem:[%s1 + $0x1b0] sm:$0xff]
    %v73 = vld [vmem:[%s1 + $0x1b8] sm:$0xff]
    %v74 = vld [vmem:[%s1 + $0x1c0] sm:$0xff]
    %v75 = vld [vmem:[%s1 + $0x1c8] sm:$0xff]
    %v76 = vld [vmem:[%s1 + $0x1d0] sm:$0xff]
    %v77 = vld [vmem:[%s1 + $0x1d8] sm:$0xff]
    %v78 = vld [vmem:[%s1 + $0x1e0] sm:$0xff]
    %v79 = vld [vmem:[%s1 + $0x1e8] sm:$0xff]
    %v80 = vld [vmem:[%s1 + $0x1f0] sm:$0xff]
    %v81 = vld [vmem:[%s1 + $0x1f8] sm:$0xff]
    %v82 = vld [vmem:[%s1 + $0x200] sm:$0xff]
    %v83 = vld [vmem:[%s1 + $0x208] sm:$0xff]
    %v84 = vld [vmem:[%s1 + $0x210] sm:$0xff]
    %v85 = vld [vmem:[%s1 + $0x218] sm:$0xff]
    %v86 = vld [vmem:[%s1 + $0x220] sm:$0xff]
    %v87 = vld [vmem:[%s1 + $0x228] sm:$0xff]
    %v88 = vld [vmem:[%s1 + $0x230] sm:$0xff]
    %v89 = vld [vmem:[%s1 + $0x238] sm:$0xff]
    %v90 = vld [vmem:[%s1 + $0x240] sm:$0xff]
    %v91 = vld [vmem:[%s1 + $0x248] sm:$0xff]
    %v92 = vld [vmem:[%s1 + $0x250] sm:$0xff]
    %v93 = vld [vmem:[%s1 + $0x258] sm:$0xff]
    %v94 = vld [vmem:[%s1 + $0x260] sm:$0xff]
    %v95 = vld [vmem:[%s1 + $0x268] sm:$0xff]
    %v96 = vld [vmem:[%s1 + $0x270] sm:$0xff]
    %v97 = vld [vmem:[%s1 + $0x278] sm:$0xff]
    %v98 = vld [vmem:[%s1 + $0x280] sm:$0xff]
    %v99 = vld [vmem:[%s1 + $0x288] sm:$0xff]
    %v100 = vld [vmem:[%s1 + $0x290] sm:$0xff]
    %v101 = vld [vmem:[%s1 + $0x298] sm:$0xff]
    %v102 = vld [vmem:[%s1 + $0x2a0] sm:$0xff]
    %v103 = vld [vmem:[%s1 + $0x2a8] sm:$0xff]
    %v104 = vld [vmem:[%s1 + $0x2b0] sm:$0xff]
    %v105 = vld [vmem:[%s1 + $0x2b8] sm:$0xff]
    %v106 = vld [vmem:[%s1 + $0x2c0] sm:$0xff]
    %v107 = vld [vmem:[%s1 + $0x2c8] sm:$0xff]
    %v108 = vld [vmem:[%s1 + $0x2d0] sm:$0xff]
    %v109 = vld [vmem:[%s1 + $0x2d8] sm:$0xff]
    %v110 = vld [vmem:[%s1 + $0x2e0] sm:$0xff]
    %v111 = vld [vmem:[%s1 + $0x2e8] sm:$0xff]
    %v112 = vld [vmem:[%s1 + $0x2f0] sm:$0xff]
    %v113 = vld [vmem:[%s1 + $0x2f8] sm:$0xff]
    %v114 = vld [vmem:[%s1 + $0x300] sm:$0xff]
    %v115 = vld [vmem:[%s1 + $0x308] sm:$0xff]
    %v116 = vld [vmem:[%s1 + $0x310] sm:$0xff]
    %v117 = vld [vmem:[%s1 + $0x318] sm:$0xff]
    %v118 = vld [vmem:[%s1 + $0x320] sm:$0xff]
    %v119 = vld [vmem:[%s1 + $0x328] sm:$0xff]
    %v120 = vld [vmem:[%s1 + $0x330] sm:$0xff]
    %v121 = vld [vmem:[%s1 + $0x338] sm:$0xff]
    %v122 = vld [vmem:[%s1 + $0x340] sm:$0xff]
    %v123 = vld [vmem:[%s1 + $0x348] sm:$0xff]
    %v124 = vld [vmem:[%s1 + $0x350] sm:$0xff]
    %v125 = vld [vmem:[%s1 + $0x358] sm:$0xff]
    %v126 = vld [vmem:[%s1 + $0x360] sm:$0xff]
    %v127 = vld [vmem:[%s1 + $0x368] sm:$0xff]
    %v128 = vld [vmem:[%s1 + $0x370] sm:$0xff]
    %v129 = vld [vmem:[%s1 + $0x378] sm:$0xff]
    %v130 = vld [vmem:[%s1 + $0x380] sm:$0xff]
    %v131 = vld [vmem:[%s1 + $0x388] sm:$0xff]
    %v132 = vld [vmem:[%s1 + $0x390] sm:$0xff]
    %v133 = vld [vmem:[%s1 + $0x398] sm:$0xff]
    %v134 = vld [vmem:[%s1 + $0x3a0] sm:$0xff]
    %v135 = vld [vmem:[%s1 + $0x3a8] sm:$0xff]
    %v136 = vld [vmem:[%s1 + $0x3b0] sm:$0xff]
    %v137 = vld [vmem:[%s1 + $0x3b8] sm:$0xff]
    %v138 = vld [vmem:[%s1 + $0x3c0] sm:$0xff]
    %v139 = vld [vmem:[%s1 + $0x3c8] sm:$0xff]
    %v140 = vld [vmem:[%s1 + $0x3d0] sm:$0xff]
    %v141 = vld [vmem:[%s1 + $0x3d8] sm:$0xff]
    %v142 = vld [vmem:[%s1 + $0x3e0] sm:$0xff]
    %v143 = vld [vmem:[%s1 + $0x3e8] sm:$0xff]
    %v144 = vld [vmem:[%s1 + $0x3f0] sm:$0xff]
    %v145 = vld [vmem:[%s1 + $0x3f8] sm:$0xff]
    %v146 = vld [vmem:[%s1 + $0x400] sm:$0xff]
    %v147 = vld [vmem:[%s1 + $0x408] sm:$0xff]
    %v148 = vld [vmem:[%s1 + $0x410] sm:$0xff]
    %v149 = vld [vmem:[%s1 + $0x418] sm:$0xff]
    %v150 = vld [vmem:[%s1 + $0x420] sm:$0xff]
    %v151 = vld [vmem:[%s1 + $0x428] sm:$0xff]
    %v152 = vld [vmem:[%s1 + $0x430] sm:$0xff]
    %v153 = vld [vmem:[%s1 + $0x438] sm:$0xff]
    %v154 = vld [vmem:[%s1 + $0x440] sm:$0xff]
    %v155 = vld [vmem:[%s1 + $0x448] sm:$0xff]
    %v156 = vld [vmem:[%s1 + $0x450] sm:$0xff]
    %v157 = vld [vmem:[%s1 + $0x458] sm:$0xff]
    %v158 = vld [vmem:[%s1 + $0x460] sm:$0xff]
    %v159 = vld [vmem:[%s1 + $0x468] sm:$0xff]
    %v160 = vld [vmem:[%s1 + $0x470] sm:$0xff]
    %v161 = vld [vmem:[%s1 + $0x478] sm:$0xff]
    %v162 = vld [vmem:[%s1 + $0x480] sm:$0xff]
    %v163 = vld [vmem:[%s1 + $0x488] sm:$0xff]
    %v164 = vld [vmem:[%s1 + $0x490] sm:$0xff]
    %v165 = vld [vmem:[%s1 + $0x498] sm:$0xff]
    %v166 = vld [vmem:[%s1 + $0x4a0] sm:$0xff]
    %v167 = vld [vmem:[%s1 + $0x4a8] sm:$0xff]
    %v168 = vld [vmem:[%s1 + $0x4b0] sm:$0xff]
    %v169 = vld [vmem:[%s1 + $0x4b8] sm:$0xff]
    %v170 = vld [vmem:[%s2] sm:$0xff]
    %v172 = vperm.slane %v170, 0
    %v173 = vperm.slane %v170, 1
    %v174 = vperm.slane %v170, 2
    %v175 = vperm.slane %v170, 3
    %v176 = vperm.slane %v170, 4
    %v177 = vperm.slane %v170, 5
    %v178 = vperm.slane %v170, 6
    %v179 = vperm.slane %v170, 7
    %v190 = vunpack.c.l.b16 %v16
    %v191 = vunpack.c.h.b16 %v16
    %v192 = vunpack.c.l.b16 %v17
    %v193 = vpack.c.b16 %v190, %v190
    %v194 = vpack.c.b16 %v191, %v191
    %v195 = vpack.c.b16 %v192, %v192
    %v350 = vunpack.c.l.b16 %v18
    %v351 = vunpack.c.h.b16 %v18
    %v352 = vunpack.c.l.b16 %v19
    %v353 = vunpack.c.h.b16 %v19
    %v354 = vunpack.c.l.b16 %v20
    %v355 = vunpack.c.h.b16 %v20
    %v356 = vunpack.c.l.b16 %v21
    %v357 = vunpack.c.h.b16 %v21
    %v358 = vunpack.c.l.b16 %v22
    %v359 = vunpack.c.h.b16 %v22
    %v360 = vunpack.c.l.b16 %v23
    %v361 = vunpack.c.h.b16 %v23
    %v362 = vunpack.c.l.b16 %v24
    %v363 = vunpack.c.h.b16 %v24
    %v364 = vunpack.c.l.b16 %v25
    %v365 = vunpack.c.h.b16 %v25
    %v366 = vunpack.c.l.b16 %v26
    %v367 = vunpack.c.h.b16 %v26
    %v368 = vunpack.c.l.b16 %v27
    %v369 = vunpack.c.h.b16 %v27
    %v370 = vunpack.c.l.b16 %v28
    %v371 = vunpack.c.h.b16 %v28
    %v372 = vunpack.c.l.b16 %v29
    %v373 = vunpack.c.h.b16 %v29
    %v374 = vunpack.c.l.b16 %v30
    %v375 = vunpack.c.h.b16 %v30
    %v376 = vunpack.c.l.b16 %v31
    %v377 = vunpack.c.h.b16 %v31
    %v378 = vunpack.c.l.b16 %v32
    %v379 = vunpack.c.h.b16 %v32
    %v380 = vunpack.c.l.b16 %v33
    %v381 = vunpack.c.h.b16 %v33
    %v382 = vunpack.c.l.b16 %v34
    %v383 = vunpack.c.h.b16 %v34
    %v384 = vunpack.c.l.b16 %v35
    %v385 = vunpack.c.h.b16 %v35
    %v386 = vunpack.c.l.b16 %v36
    %v387 = vunpack.c.h.b16 %v36
    %v388 = vunpack.c.l.b16 %v37
    %v389 = vunpack.c.h.b16 %v37
    %v390 = vunpack.c.l.b16 %v38
    %v391 = vunpack.c.h.b16 %v38
    %v392 = vunpack.c.l.b16 %v39
    %v393 = vunpack.c.h.b16 %v39
    %v394 = vunpack.c.l.b16 %v40
    %v395 = vunpack.c.h.b16 %v40
    %v396 = vunpack.c.l.b16 %v41
    %v397 = vunpack.c.h.b16 %v41
    %v398 = vunpack.c.l.b16 %v42
    %v399 = vunpack.c.h.b16 %v42
    %v400 = vunpack.c.l.b16 %v43
    %v401 = vunpack.c.h.b16 %v43
    %v402 = vunpack.c.l.b16 %v44
    %v403 = vunpack.c.h.b16 %v44
    %v404 = vunpack.c.l.b16 %v45
    %v405 = vunpack.c.h.b16 %v45
    %v406 = vunpack.c.l.b16 %v46
    %v407 = vunpack.c.h.b16 %v46
    %v408 = vunpack.c.l.b16 %v47
    %v409 = vunpack.c.h.b16 %v47
    %v410 = vunpack.c.l.b16 %v48
    %v411 = vunpack.c.h.b16 %v48
    %v412 = vunpack.c.l.b16 %v49
    %v413 = vunpack.c.h.b16 %v49
    %v414 = vunpack.c.l.b16 %v50
    %v415 = vunpack.c.h.b16 %v50
    %v416 = vunpack.c.l.b16 %v51
    %v417 = vunpack.c.h.b16 %v51
    %v418 = vunpack.c.l.b16 %v52
    %v419 = vunpack.c.h.b16 %v52
    %v420 = vunpack.c.l.b16 %v53
    %v421 = vunpack.c.h.b16 %v53
    %v422 = vunpack.c.l.b16 %v54
    %v423 = vunpack.c.h.b16 %v54
    %v424 = vunpack.c.l.b16 %v55
    %v425 = vunpack.c.h.b16 %v55
    %v426 = vunpack.c.l.b16 %v56
    %v427 = vunpack.c.h.b16 %v56
    %v428 = vunpack.c.l.b16 %v57
    %v429 = vunpack.c.h.b16 %v57
    %v430 = vunpack.c.l.b16 %v58
    %v431 = vunpack.c.h.b16 %v58
    %v432 = vunpack.c.l.b16 %v59
    %v433 = vunpack.c.h.b16 %v59
    %v434 = vunpack.c.l.b16 %v60
    %v435 = vunpack.c.h.b16 %v60
    %v436 = vunpack.c.l.b16 %v61
    %v437 = vunpack.c.h.b16 %v61
    %v438 = vunpack.c.l.b16 %v62
    %v439 = vunpack.c.h.b16 %v62
    %v440 = vunpack.c.l.b16 %v63
    %v441 = vunpack.c.h.b16 %v63
    %v442 = vunpack.c.l.b16 %v64
    %v443 = vunpack.c.h.b16 %v64
    %v444 = vunpack.c.l.b16 %v65
    %v445 = vunpack.c.h.b16 %v65
    %v446 = vunpack.c.l.b16 %v66
    %v447 = vunpack.c.h.b16 %v66
    %v448 = vunpack.c.l.b16 %v67
    %v449 = vunpack.c.h.b16 %v67
    %v450 = vunpack.c.l.b16 %v68
    %v451 = vunpack.c.h.b16 %v68
    %v452 = vunpack.c.l.b16 %v69
    %v453 = vunpack.c.h.b16 %v69
    %v454 = vunpack.c.l.b16 %v70
    %v455 = vunpack.c.h.b16 %v70
    %v456 = vunpack.c.l.b16 %v71
    %v457 = vunpack.c.h.b16 %v71
    %v458 = vunpack.c.l.b16 %v72
    %v459 = vunpack.c.h.b16 %v72
    %v460 = vunpack.c.l.b16 %v73
    %v461 = vunpack.c.h.b16 %v73
    %v462 = vunpack.c.l.b16 %v74
    %v463 = vunpack.c.h.b16 %v74
    %v464 = vunpack.c.l.b16 %v75
    %v465 = vunpack.c.h.b16 %v75
    %v466 = vunpack.c.l.b16 %v76
    %v467 = vunpack.c.h.b16 %v76
    %v468 = vunpack.c.l.b16 %v77
    %v469 = vunpack.c.h.b16 %v77
    %v470 = vunpack.c.l.b16 %v78
    %v471 = vunpack.c.h.b16 %v78
    %v472 = vunpack.c.l.b16 %v79
    %v473 = vunpack.c.h.b16 %v79
    %v474 = vunpack.c.l.b16 %v80
    %v475 = vunpack.c.h.b16 %v80
    %v476 = vunpack.c.l.b16 %v81
    %v477 = vunpack.c.h.b16 %v81
    %v478 = vunpack.c.l.b16 %v82
    %v479 = vunpack.c.h.b16 %v82
    %v480 = vunpack.c.l.b16 %v83
    %v481 = vunpack.c.h.b16 %v83
    %v482 = vunpack.c.l.b16 %v84
    %v483 = vunpack.c.h.b16 %v84
    %v484 = vunpack.c.l.b16 %v85
    %v485 = vunpack.c.h.b16 %v85
    %v486 = vunpack.c.l.b16 %v86
    %v487 = vunpack.c.h.b16 %v86
    %v488 = vunpack.c.l.b16 %v87
    %v489 = vunpack.c.h.b16 %v87
    %v490 = vunpack.c.l.b16 %v88
    %v491 = vunpack.c.h.b16 %v88
    %v492 = vunpack.c.l.b16 %v89
    %v493 = vunpack.c.h.b16 %v89
    %v494 = vunpack.c.l.b16 %v90
    %v495 = vunpack.c.h.b16 %v90
    %v496 = vunpack.c.l.b16 %v91
    %v497 = vunpack.c.h.b16 %v91
    %v498 = vunpack.c.l.b16 %v92
    %v499 = vunpack.c.h.b16 %v92
    %v500 = vunpack.c.l.b16 %v93
    %v501 = vunpack.c.h.b16 %v93
    %v502 = vunpack.c.l.b16 %v94
    %v503 = vunpack.c.h.b16 %v94
    %v504 = vunpack.c.l.b16 %v95
    %v505 = vunpack.c.h.b16 %v95
    %v506 = vunpack.c.l.b16 %v96
    %v507 = vunpack.c.h.b16 %v96
    %v508 = vunpack.c.l.b16 %v97
    %v509 = vunpack.c.h.b16 %v97
    %v510 = vunpack.c.l.b16 %v98
    %v511 = vunpack.c.h.b16 %v98
    %v512 = vunpack.c.l.b16 %v99
    %v513 = vunpack.c.h.b16 %v99
    %v514 = vunpack.c.l.b16 %v100
    %v515 = vunpack.c.h.b16 %v100
    %v516 = vunpack.c.l.b16 %v101
    %v517 = vunpack.c.h.b16 %v101
    %v518 = vunpack.c.l.b16 %v102
    %v519 = vunpack.c.h.b16 %v102
    %v520 = vunpack.c.l.b16 %v103
    %v521 = vunpack.c.h.b16 %v103
    %v522 = vunpack.c.l.b16 %v104
    %v523 = vunpack.c.h.b16 %v104
    %v524 = vunpack.c.l.b16 %v105
    %v525 = vunpack.c.h.b16 %v105
    %v526 = vunpack.c.l.b16 %v106
    %v527 = vunpack.c.h.b16 %v106
    %v528 = vunpack.c.l.b16 %v107
    %v529 = vunpack.c.h.b16 %v107
    %v530 = vunpack.c.l.b16 %v108
    %v531 = vunpack.c.h.b16 %v108
    %v532 = vunpack.c.l.b16 %v109
    %v533 = vunpack.c.h.b16 %v109
    %v534 = vunpack.c.l.b16 %v110
    %v535 = vunpack.c.h.b16 %v110
    %v536 = vunpack.c.l.b16 %v111
    %v537 = vunpack.c.h.b16 %v111
    %v538 = vunpack.c.l.b16 %v112
    %v539 = vunpack.c.h.b16 %v112
    %v540 = vunpack.c.l.b16 %v113
    %v541 = vunpack.c.h.b16 %v113
    %v542 = vunpack.c.l.b16 %v114
    %v543 = vunpack.c.h.b16 %v114
    %v544 = vunpack.c.l.b16 %v115
    %v545 = vunpack.c.h.b16 %v115
    %v546 = vunpack.c.l.b16 %v116
    %v547 = vunpack.c.h.b16 %v116
    %v548 = vunpack.c.l.b16 %v117
    %v549 = vunpack.c.h.b16 %v117
    %v550 = vunpack.c.l.b16 %v118
    %v551 = vunpack.c.h.b16 %v118
    %v552 = vunpack.c.l.b16 %v119
    %v553 = vunpack.c.h.b16 %v119
    %v554 = vunpack.c.l.b16 %v120
    %v555 = vunpack.c.h.b16 %v120
    %v556 = vunpack.c.l.b16 %v121
    %v557 = vunpack.c.h.b16 %v121
    %v558 = vunpack.c.l.b16 %v122
    %v559 = vunpack.c.h.b16 %v122
    %v560 = vunpack.c.l.b16 %v123
    %v561 = vunpack.c.h.b16 %v123
    %v562 = vunpack.c.l.b16 %v124
    %v563 = vunpack.c.h.b16 %v124
    %v564 = vunpack.c.l.b16 %v125
    %v565 = vunpack.c.h.b16 %v125
    %v566 = vunpack.c.l.b16 %v126
    %v567 = vunpack.c.h.b16 %v126
    %v568 = vunpack.c.l.b16 %v127
    %v569 = vunpack.c.h.b16 %v127
    %v570 = vunpack.c.l.b16 %v128
    %v571 = vunpack.c.h.b16 %v128
    %v572 = vunpack.c.l.b16 %v129
    %v573 = vunpack.c.h.b16 %v129
    %v574 = vunpack.c.l.b16 %v130
    %v575 = vunpack.c.h.b16 %v130
    %v576 = vunpack.c.l.b16 %v131
    %v577 = vunpack.c.h.b16 %v131
    %v578 = vunpack.c.l.b16 %v132
    %v579 = vunpack.c.h.b16 %v132
    %v580 = vunpack.c.l.b16 %v133
    %v581 = vunpack.c.h.b16 %v133
    %v582 = vunpack.c.l.b16 %v134
    %v583 = vunpack.c.h.b16 %v134
    %v584 = vunpack.c.l.b16 %v135
    %v585 = vunpack.c.h.b16 %v135
    %v586 = vunpack.c.l.b16 %v136
    %v587 = vunpack.c.h.b16 %v136
    %v588 = vunpack.c.l.b16 %v137
    %v589 = vunpack.c.h.b16 %v137
    %v590 = vunpack.c.l.b16 %v138
    %v591 = vunpack.c.h.b16 %v138
    %v592 = vunpack.c.l.b16 %v139
    %v593 = vunpack.c.h.b16 %v139
    %v594 = vunpack.c.l.b16 %v140
    %v595 = vunpack.c.h.b16 %v140
    %v596 = vunpack.c.l.b16 %v141
    %v597 = vunpack.c.h.b16 %v141
    %v598 = vunpack.c.l.b16 %v142
    %v599 = vunpack.c.h.b16 %v142
    %v600 = vunpack.c.l.b16 %v143
    %v601 = vunpack.c.h.b16 %v143
    %v602 = vunpack.c.l.b16 %v144
    %v603 = vunpack.c.h.b16 %v144
    %v604 = vunpack.c.l.b16 %v145
    %v605 = vunpack.c.h.b16 %v145
    %v606 = vunpack.c.l.b16 %v146
    %v607 = vunpack.c.h.b16 %v146
    %v608 = vunpack.c.l.b16 %v147
    %v609 = vunpack.c.h.b16 %v147
    %v610 = vunpack.c.l.b16 %v148
    %v611 = vunpack.c.h.b16 %v148
    %v612 = vunpack.c.l.b16 %v149
    %v613 = vunpack.c.h.b16 %v149
    %v614 = vunpack.c.l.b16 %v150
    %v615 = vunpack.c.h.b16 %v150
    %v616 = vunpack.c.l.b16 %v151
    %v617 = vunpack.c.h.b16 %v151
    %v618 = vunpack.c.l.b16 %v152
    %v619 = vunpack.c.h.b16 %v152
    %v620 = vunpack.c.l.b16 %v153
    %v621 = vunpack.c.h.b16 %v153
    %v622 = vunpack.c.l.b16 %v154
    %v623 = vunpack.c.h.b16 %v154
    %v624 = vunpack.c.l.b16 %v155
    %v625 = vunpack.c.h.b16 %v155
    %v626 = vunpack.c.l.b16 %v156
    %v627 = vunpack.c.h.b16 %v156
    %v628 = vunpack.c.l.b16 %v157
    %v629 = vunpack.c.h.b16 %v157
    %v630 = vunpack.c.l.b16 %v158
    %v631 = vunpack.c.h.b16 %v158
    %v632 = vunpack.c.l.b16 %v159
    %v633 = vunpack.c.h.b16 %v159
    %v634 = vunpack.c.l.b16 %v160
    %v635 = vunpack.c.h.b16 %v160
    %v636 = vunpack.c.l.b16 %v161
    %v637 = vunpack.c.h.b16 %v161
    %v638 = vunpack.c.l.b16 %v162
    %v639 = vunpack.c.h.b16 %v162
    %v640 = vunpack.c.l.b16 %v163
    %v641 = vunpack.c.h.b16 %v163
    %v642 = vunpack.c.l.b16 %v164
    %v643 = vunpack.c.h.b16 %v164
    %v644 = vunpack.c.l.b16 %v165
    %v645 = vunpack.c.h.b16 %v165
    %v646 = vunpack.c.l.b16 %v166
    %v647 = vunpack.c.h.b16 %v166
    %v648 = vunpack.c.l.b16 %v167
    %v649 = vunpack.c.h.b16 %v167
    %v650 = vunpack.c.l.b16 %v168
    %v651 = vunpack.c.h.b16 %v168
    %v652 = vunpack.c.l.b16 %v169
    %v653 = vunpack.c.h.b16 %v169
    %v654 = vpack.c.b16 %v358, %v350
    %v655 = vpack.c.b16 %v359, %v351
    %v656 = vpack.c.b16 %v360, %v352
    %v657 = vpack.c.b16 %v361, %v353
    %v658 = vpack.c.b16 %v362, %v354
    %v659 = vpack.c.b16 %v363, %v355
    %v660 = vpack.c.b16 %v364, %v356
    %v661 = vpack.c.b16 %v365, %v357
    %v662 = vpack.c.b16 %v374, %v366
    %v663 = vpack.c.b16 %v375, %v367
    %v664 = vpack.c.b16 %v376, %v368
    %v665 = vpack.c.b16 %v377, %v369
    %v666 = vpack.c.b16 %v378, %v370
    %v667 = vpack.c.b16 %v379, %v371
    %v668 = vpack.c.b16 %v380, %v372
    %v669 = vpack.c.b16 %v381, %v373
    %v670 = vpack.c.b16 %v390, %v382
    %v671 = vpack.c.b16 %v391, %v383
    %v672 = vpack.c.b16 %v392, %v384
    %v673 = vpack.c.b16 %v393, %v385
    %v674 = vpack.c.b16 %v394, %v386
    %v675 = vpack.c.b16 %v395, %v387
    %v676 = vpack.c.b16 %v396, %v388
    %v677 = vpack.c.b16 %v397, %v389
    %v678 = vpack.c.b16 %v406, %v398
    %v679 = vpack.c.b16 %v407, %v399
    %v680 = vpack.c.b16 %v408, %v400
    %v681 = vpack.c.b16 %v409, %v401
    %v682 = vpack.c.b16 %v410, %v402
    %v683 = vpack.c.b16 %v411, %v403
    %v684 = vpack.c.b16 %v412, %v404
    %v685 = vpack.c.b16 %v413, %v405
    %v686 = vpack.c.b16 %v422, %v414
    %v687 = vpack.c.b16 %v423, %v415
    %v688 = vpack.c.b16 %v424, %v416
    %v689 = vpack.c.b16 %v425, %v417
    %v690 = vpack.c.b16 %v426, %v418
    %v691 = vpack.c.b16 %v427, %v419
    %v692 = vpack.c.b16 %v428, %v420
    %v693 = vpack.c.b16 %v429, %v421
    %v694 = vpack.c.b16 %v438, %v430
    %v695 = vpack.c.b16 %v439, %v431
    %v696 = vpack.c.b16 %v440, %v432
    %v697 = vpack.c.b16 %v441, %v433
    %v698 = vpack.c.b16 %v442, %v434
    %v699 = vpack.c.b16 %v443, %v435
    %v700 = vpack.c.b16 %v444, %v436
    %v701 = vpack.c.b16 %v445, %v437
    %v702 = vpack.c.b16 %v454, %v446
    %v703 = vpack.c.b16 %v455, %v447
    %v704 = vpack.c.b16 %v456, %v448
    %v705 = vpack.c.b16 %v457, %v449
    %v706 = vpack.c.b16 %v458, %v450
    %v707 = vpack.c.b16 %v459, %v451
    %v708 = vpack.c.b16 %v460, %v452
    %v709 = vpack.c.b16 %v461, %v453
    %v710 = vpack.c.b16 %v470, %v462
    %v711 = vpack.c.b16 %v471, %v463
    %v712 = vpack.c.b16 %v472, %v464
    %v713 = vpack.c.b16 %v473, %v465
    %v714 = vpack.c.b16 %v474, %v466
    %v715 = vpack.c.b16 %v475, %v467
    %v716 = vpack.c.b16 %v476, %v468
    %v717 = vpack.c.b16 %v477, %v469
    %v718 = vpack.c.b16 %v486, %v478
    %v719 = vpack.c.b16 %v487, %v479
    %v720 = vpack.c.b16 %v488, %v480
    %v721 = vpack.c.b16 %v489, %v481
    %v722 = vpack.c.b16 %v490, %v482
    %v723 = vpack.c.b16 %v491, %v483
    %v724 = vpack.c.b16 %v492, %v484
    %v725 = vpack.c.b16 %v493, %v485
    %v726 = vpack.c.b16 %v502, %v494
    %v727 = vpack.c.b16 %v503, %v495
    %v728 = vpack.c.b16 %v504, %v496
    %v729 = vpack.c.b16 %v505, %v497
    %v730 = vpack.c.b16 %v506, %v498
    %v731 = vpack.c.b16 %v507, %v499
    %v732 = vpack.c.b16 %v508, %v500
    %v733 = vpack.c.b16 %v509, %v501
    %v734 = vpack.c.b16 %v518, %v510
    %v735 = vpack.c.b16 %v519, %v511
    %v736 = vpack.c.b16 %v520, %v512
    %v737 = vpack.c.b16 %v521, %v513
    %v738 = vpack.c.b16 %v522, %v514
    %v739 = vpack.c.b16 %v523, %v515
    %v740 = vpack.c.b16 %v524, %v516
    %v741 = vpack.c.b16 %v525, %v517
    %v742 = vpack.c.b16 %v534, %v526
    %v743 = vpack.c.b16 %v535, %v527
    %v744 = vpack.c.b16 %v536, %v528
    %v745 = vpack.c.b16 %v537, %v529
    %v746 = vpack.c.b16 %v538, %v530
    %v747 = vpack.c.b16 %v539, %v531
    %v748 = vpack.c.b16 %v540, %v532
    %v749 = vpack.c.b16 %v541, %v533
    %v750 = vpack.c.b16 %v550, %v542
    %v751 = vpack.c.b16 %v551, %v543
    %v752 = vpack.c.b16 %v552, %v544
    %v753 = vpack.c.b16 %v553, %v545
    %v754 = vpack.c.b16 %v554, %v546
    %v755 = vpack.c.b16 %v555, %v547
    %v756 = vpack.c.b16 %v556, %v548
    %v757 = vpack.c.b16 %v557, %v549
    %v758 = vpack.c.b16 %v566, %v558
    %v759 = vpack.c.b16 %v567, %v559
    %v760 = vpack.c.b16 %v568, %v560
    %v761 = vpack.c.b16 %v569, %v561
    %v762 = vpack.c.b16 %v570, %v562
    %v763 = vpack.c.b16 %v571, %v563
    %v764 = vpack.c.b16 %v572, %v564
    %v765 = vpack.c.b16 %v573, %v565
    %v766 = vpack.c.b16 %v582, %v574
    %v767 = vpack.c.b16 %v583, %v575
    %v768 = vpack.c.b16 %v584, %v576
    %v769 = vpack.c.b16 %v585, %v577
    %v770 = vpack.c.b16 %v586, %v578
    %v771 = vpack.c.b16 %v587, %v579
    %v772 = vpack.c.b16 %v588, %v580
    %v773 = vpack.c.b16 %v589, %v581
    %v774 = vpack.c.b16 %v598, %v590
    %v775 = vpack.c.b16 %v599, %v591
    %v776 = vpack.c.b16 %v600, %v592
    %v777 = vpack.c.b16 %v601, %v593
    %v778 = vpack.c.b16 %v602, %v594
    %v779 = vpack.c.b16 %v603, %v595
    %v780 = vpack.c.b16 %v604, %v596
    %v781 = vpack.c.b16 %v605, %v597
    %v782 = vpack.c.b16 %v614, %v606
    %v783 = vpack.c.b16 %v615, %v607
    %v784 = vpack.c.b16 %v616, %v608
    %v785 = vpack.c.b16 %v617, %v609
    %v786 = vpack.c.b16 %v618, %v610
    %v787 = vpack.c.b16 %v619, %v611
    %v788 = vpack.c.b16 %v620, %v612
    %v789 = vpack.c.b16 %v621, %v613
    %v790 = vpack.c.b16 %v630, %v622
    %v791 = vpack.c.b16 %v631, %v623
    %v792 = vpack.c.b16 %v632, %v624
    %v793 = vpack.c.b16 %v633, %v625
    %v794 = vpack.c.b16 %v634, %v626
    %v795 = vpack.c.b16 %v635, %v627
    %v796 = vpack.c.b16 %v636, %v628
    %v797 = vpack.c.b16 %v637, %v629
    %v798 = vpack.c.b16 %v646, %v638
    %v799 = vpack.c.b16 %v647, %v639
    %v800 = vpack.c.b16 %v648, %v640
    %v801 = vpack.c.b16 %v649, %v641
    %v802 = vpack.c.b16 %v650, %v642
    %v803 = vpack.c.b16 %v651, %v643
    %v804 = vpack.c.b16 %v652, %v644
    %v805 = vpack.c.b16 %v653, %v645
    %vm958 = vcmask 392192
    %v960 = vsel %vm958, %v195, 0
    %962 = vmatpush.bf16.msra.mxu0 %v710
    %963 = vmatpush.bf16.msra.mxu0 %v702
    %964 = vmatpush.bf16.msra.mxu0 %v694
    %965 = vmatpush.bf16.msra.mxu0 %v686
    %966 = vmatpush.bf16.msra.mxu0 %v678
    %967 = vmatpush.bf16.msra.mxu0 %v670
    %968 = vmatpush.bf16.msra.mxu0 %v662
    %969 = vmatpush.bf16.msra.mxu0 %v654
    %970 = vmatmul.bf16.gmra.mxu0 %v193
    %v971 = vpop.f32.mrf.mxu0
    %v972 = vadd.f32 %v172, %v971
    %v973 = vpop.f32.mrf.mxu0
    %974 = vdwg.mxu0
    %975 = vmatpush.bf16.msra.mxu0 %v774
    %976 = vmatpush.bf16.msra.mxu0 %v766
    %977 = vmatpush.bf16.msra.mxu0 %v758
    %978 = vmatpush.bf16.msra.mxu0 %v750
    %979 = vmatpush.bf16.msra.mxu0 %v742
    %980 = vmatpush.bf16.msra.mxu0 %v734
    %981 = vmatpush.bf16.msra.mxu0 %v726
    %982 = vmatpush.bf16.msra.mxu0 %v718
    %983 = vmatmul.bf16.gmra.mxu0 %v194
    %v984 = vpop.f32.mrf.mxu0
    %v985 = vadd.f32 %v972, %v984
    %v986 = vpop.f32.mrf.mxu0
    %987 = vdwg.mxu0
    %988 = vmatpush.bf16.msra.mxu0 0
    %989 = vmatpush.bf16.msra.mxu0 0
    %990 = vmatpush.bf16.msra.mxu0 0
    %991 = vmatpush.bf16.msra.mxu0 0
    %992 = vmatpush.bf16.msra.mxu0 0
    %993 = vmatpush.bf16.msra.mxu0 %v798
    %994 = vmatpush.bf16.msra.mxu0 %v790
    %995 = vmatpush.bf16.msra.mxu0 %v782
    %996 = vmatmul.bf16.gmra.mxu0 %v960
    %v997 = vpop.f32.mrf.mxu0
    %v998 = vadd.f32 %v985, %v997
    %v999 = vpop.f32.mrf.mxu0
    %1000 = vdwg.mxu0
    %1001 = vmatpush.bf16.msra.mxu0 %v711
    %1002 = vmatpush.bf16.msra.mxu0 %v703
    %1003 = vmatpush.bf16.msra.mxu0 %v695
    %1004 = vmatpush.bf16.msra.mxu0 %v687
    %1005 = vmatpush.bf16.msra.mxu0 %v679
    %1006 = vmatpush.bf16.msra.mxu0 %v671
    %1007 = vmatpush.bf16.msra.mxu0 %v663
    %1008 = vmatpush.bf16.msra.mxu0 %v655
    %1009 = vmatmul.bf16.gmra.mxu0 %v193
    %v1010 = vpop.f32.mrf.mxu0
    %v1011 = vadd.f32 %v173, %v1010
    %v1012 = vpop.f32.mrf.mxu0
    %1013 = vdwg.mxu0
    %1014 = vmatpush.bf16.msra.mxu0 %v775
    %1015 = vmatpush.bf16.msra.mxu0 %v767
    %1016 = vmatpush.bf16.msra.mxu0 %v759
    %1017 = vmatpush.bf16.msra.mxu0 %v751
    %1018 = vmatpush.bf16.msra.mxu0 %v743
    %1019 = vmatpush.bf16.msra.mxu0 %v735
    %1020 = vmatpush.bf16.msra.mxu0 %v727
    %1021 = vmatpush.bf16.msra.mxu0 %v719
    %1022 = vmatmul.bf16.gmra.mxu0 %v194
    %v1023 = vpop.f32.mrf.mxu0
    %v1024 = vadd.f32 %v1011, %v1023
    %v1025 = vpop.f32.mrf.mxu0
    %1026 = vdwg.mxu0
    %1027 = vmatpush.bf16.msra.mxu0 0
    %1028 = vmatpush.bf16.msra.mxu0 0
    %1029 = vmatpush.bf16.msra.mxu0 0
    %1030 = vmatpush.bf16.msra.mxu0 0
    %1031 = vmatpush.bf16.msra.mxu0 0
    %1032 = vmatpush.bf16.msra.mxu0 %v799
    %1033 = vmatpush.bf16.msra.mxu0 %v791
    %1034 = vmatpush.bf16.msra.mxu0 %v783
    %1035 = vmatmul.bf16.gmra.mxu0 %v960
    %v1036 = vpop.f32.mrf.mxu0
    %v1037 = vadd.f32 %v1024, %v1036
    %v1038 = vpop.f32.mrf.mxu0
    %1039 = vdwg.mxu0
    %1040 = vmatpush.bf16.msra.mxu0 %v712
    %1041 = vmatpush.bf16.msra.mxu0 %v704
    %1042 = vmatpush.bf16.msra.mxu0 %v696
    %1043 = vmatpush.bf16.msra.mxu0 %v688
    %1044 = vmatpush.bf16.msra.mxu0 %v680
    %1045 = vmatpush.bf16.msra.mxu0 %v672
    %1046 = vmatpush.bf16.msra.mxu0 %v664
    %1047 = vmatpush.bf16.msra.mxu0 %v656
    %1048 = vmatmul.bf16.gmra.mxu0 %v193
    %v1049 = vpop.f32.mrf.mxu0
    %v1050 = vadd.f32 %v174, %v1049
    %v1051 = vpop.f32.mrf.mxu0
    %1052 = vdwg.mxu0
    %1053 = vmatpush.bf16.msra.mxu0 %v776
    %1054 = vmatpush.bf16.msra.mxu0 %v768
    %1055 = vmatpush.bf16.msra.mxu0 %v760
    %1056 = vmatpush.bf16.msra.mxu0 %v752
    %1057 = vmatpush.bf16.msra.mxu0 %v744
    %1058 = vmatpush.bf16.msra.mxu0 %v736
    %1059 = vmatpush.bf16.msra.mxu0 %v728
    %1060 = vmatpush.bf16.msra.mxu0 %v720
    %1061 = vmatmul.bf16.gmra.mxu0 %v194
    %v1062 = vpop.f32.mrf.mxu0
    %v1063 = vadd.f32 %v1050, %v1062
    %v1064 = vpop.f32.mrf.mxu0
    %1065 = vdwg.mxu0
    %1066 = vmatpush.bf16.msra.mxu0 0
    %1067 = vmatpush.bf16.msra.mxu0 0
    %1068 = vmatpush.bf16.msra.mxu0 0
    %1069 = vmatpush.bf16.msra.mxu0 0
    %1070 = vmatpush.bf16.msra.mxu0 0
    %1071 = vmatpush.bf16.msra.mxu0 %v800
    %1072 = vmatpush.bf16.msra.mxu0 %v792
    %1073 = vmatpush.bf16.msra.mxu0 %v784
    %1074 = vmatmul.bf16.gmra.mxu0 %v960
    %v1075 = vpop.f32.mrf.mxu0
    %v1076 = vadd.f32 %v1063, %v1075
    %v1077 = vpop.f32.mrf.mxu0
    %1078 = vdwg.mxu0
    %1079 = vmatpush.bf16.msra.mxu0 %v713
    %1080 = vmatpush.bf16.msra.mxu0 %v705
    %1081 = vmatpush.bf16.msra.mxu0 %v697
    %1082 = vmatpush.bf16.msra.mxu0 %v689
    %1083 = vmatpush.bf16.msra.mxu0 %v681
    %1084 = vmatpush.bf16.msra.mxu0 %v673
    %1085 = vmatpush.bf16.msra.mxu0 %v665
    %1086 = vmatpush.bf16.msra.mxu0 %v657
    %1087 = vmatmul.bf16.gmra.mxu0 %v193
    %v1088 = vpop.f32.mrf.mxu0
    %v1089 = vadd.f32 %v175, %v1088
    %v1090 = vpop.f32.mrf.mxu0
    %1091 = vdwg.mxu0
    %1092 = vmatpush.bf16.msra.mxu0 %v777
    %1093 = vmatpush.bf16.msra.mxu0 %v769
    %1094 = vmatpush.bf16.msra.mxu0 %v761
    %1095 = vmatpush.bf16.msra.mxu0 %v753
    %1096 = vmatpush.bf16.msra.mxu0 %v745
    %1097 = vmatpush.bf16.msra.mxu0 %v737
    %1098 = vmatpush.bf16.msra.mxu0 %v729
    %1099 = vmatpush.bf16.msra.mxu0 %v721
    %1100 = vmatmul.bf16.gmra.mxu0 %v194
    %v1101 = vpop.f32.mrf.mxu0
    %v1102 = vadd.f32 %v1089, %v1101
    %v1103 = vpop.f32.mrf.mxu0
    %1104 = vdwg.mxu0
    %1105 = vmatpush.bf16.msra.mxu0 0
    %1106 = vmatpush.bf16.msra.mxu0 0
    %1107 = vmatpush.bf16.msra.mxu0 0
    %1108 = vmatpush.bf16.msra.mxu0 0
    %1109 = vmatpush.bf16.msra.mxu0 0
    %1110 = vmatpush.bf16.msra.mxu0 %v801
    %1111 = vmatpush.bf16.msra.mxu0 %v793
    %1112 = vmatpush.bf16.msra.mxu0 %v785
    %1113 = vmatmul.bf16.gmra.mxu0 %v960
    %v1114 = vpop.f32.mrf.mxu0
    %v1115 = vadd.f32 %v1102, %v1114
    %v1116 = vpop.f32.mrf.mxu0
    %1117 = vdwg.mxu0
    %1118 = vmatpush.bf16.msra.mxu0 %v714
    %1119 = vmatpush.bf16.msra.mxu0 %v706
    %1120 = vmatpush.bf16.msra.mxu0 %v698
    %1121 = vmatpush.bf16.msra.mxu0 %v690
    %1122 = vmatpush.bf16.msra.mxu0 %v682
    %1123 = vmatpush.bf16.msra.mxu0 %v674
    %1124 = vmatpush.bf16.msra.mxu0 %v666
    %1125 = vmatpush.bf16.msra.mxu0 %v658
    %1126 = vmatmul.bf16.gmra.mxu0 %v193
    %v1127 = vpop.f32.mrf.mxu0
    %v1128 = vadd.f32 %v176, %v1127
    %v1129 = vpop.f32.mrf.mxu0
    %1130 = vdwg.mxu0
    %1131 = vmatpush.bf16.msra.mxu0 %v778
    %1132 = vmatpush.bf16.msra.mxu0 %v770
    %1133 = vmatpush.bf16.msra.mxu0 %v762
    %1134 = vmatpush.bf16.msra.mxu0 %v754
    %1135 = vmatpush.bf16.msra.mxu0 %v746
    %1136 = vmatpush.bf16.msra.mxu0 %v738
    %1137 = vmatpush.bf16.msra.mxu0 %v730
    %1138 = vmatpush.bf16.msra.mxu0 %v722
    %1139 = vmatmul.bf16.gmra.mxu0 %v194
    %v1140 = vpop.f32.mrf.mxu0
    %v1141 = vadd.f32 %v1128, %v1140
    %v1142 = vpop.f32.mrf.mxu0
    %1143 = vdwg.mxu0
    %1144 = vmatpush.bf16.msra.mxu0 0
    %1145 = vmatpush.bf16.msra.mxu0 0
    %1146 = vmatpush.bf16.msra.mxu0 0
    %1147 = vmatpush.bf16.msra.mxu0 0
    %1148 = vmatpush.bf16.msra.mxu0 0
    %1149 = vmatpush.bf16.msra.mxu0 %v802
    %1150 = vmatpush.bf16.msra.mxu0 %v794
    %1151 = vmatpush.bf16.msra.mxu0 %v786
    %1152 = vmatmul.bf16.gmra.mxu0 %v960
    %v1153 = vpop.f32.mrf.mxu0
    %v1154 = vadd.f32 %v1141, %v1153
    %v1155 = vpop.f32.mrf.mxu0
    %1156 = vdwg.mxu0
    %1157 = vmatpush.bf16.msra.mxu0 %v715
    %1158 = vmatpush.bf16.msra.mxu0 %v707
    %1159 = vmatpush.bf16.msra.mxu0 %v699
    %1160 = vmatpush.bf16.msra.mxu0 %v691
    %1161 = vmatpush.bf16.msra.mxu0 %v683
    %1162 = vmatpush.bf16.msra.mxu0 %v675
    %1163 = vmatpush.bf16.msra.mxu0 %v667
    %1164 = vmatpush.bf16.msra.mxu0 %v659
    %1165 = vmatmul.bf16.gmra.mxu0 %v193
    %v1166 = vpop.f32.mrf.mxu0
    %v1167 = vadd.f32 %v177, %v1166
    %v1168 = vpop.f32.mrf.mxu0
    %1169 = vdwg.mxu0
    %1170 = vmatpush.bf16.msra.mxu0 %v779
    %1171 = vmatpush.bf16.msra.mxu0 %v771
    %1172 = vmatpush.bf16.msra.mxu0 %v763
    %1173 = vmatpush.bf16.msra.mxu0 %v755
    %1174 = vmatpush.bf16.msra.mxu0 %v747
    %1175 = vmatpush.bf16.msra.mxu0 %v739
    %1176 = vmatpush.bf16.msra.mxu0 %v731
    %1177 = vmatpush.bf16.msra.mxu0 %v723
    %1178 = vmatmul.bf16.gmra.mxu0 %v194
    %v1179 = vpop.f32.mrf.mxu0
    %v1180 = vadd.f32 %v1167, %v1179
    %v1181 = vpop.f32.mrf.mxu0
    %1182 = vdwg.mxu0
    %1183 = vmatpush.bf16.msra.mxu0 0
    %1184 = vmatpush.bf16.msra.mxu0 0
    %1185 = vmatpush.bf16.msra.mxu0 0
    %1186 = vmatpush.bf16.msra.mxu0 0
    %1187 = vmatpush.bf16.msra.mxu0 0
    %1188 = vmatpush.bf16.msra.mxu0 %v803
    %1189 = vmatpush.bf16.msra.mxu0 %v795
    %1190 = vmatpush.bf16.msra.mxu0 %v787
    %1191 = vmatmul.bf16.gmra.mxu0 %v960
    %v1192 = vpop.f32.mrf.mxu0
    %v1193 = vadd.f32 %v1180, %v1192
    %v1194 = vpop.f32.mrf.mxu0
    %1195 = vdwg.mxu0
    %1196 = vmatpush.bf16.msra.mxu0 %v716
    %1197 = vmatpush.bf16.msra.mxu0 %v708
    %1198 = vmatpush.bf16.msra.mxu0 %v700
    %1199 = vmatpush.bf16.msra.mxu0 %v692
    %1200 = vmatpush.bf16.msra.mxu0 %v684
    %1201 = vmatpush.bf16.msra.mxu0 %v676
    %1202 = vmatpush.bf16.msra.mxu0 %v668
    %1203 = vmatpush.bf16.msra.mxu0 %v660
    %1204 = vmatmul.bf16.gmra.mxu0 %v193
    %v1205 = vpop.f32.mrf.mxu0
    %v1206 = vadd.f32 %v178, %v1205
    %v1207 = vpop.f32.mrf.mxu0
    %1208 = vdwg.mxu0
    %1209 = vmatpush.bf16.msra.mxu0 %v780
    %1210 = vmatpush.bf16.msra.mxu0 %v772
    %1211 = vmatpush.bf16.msra.mxu0 %v764
    %1212 = vmatpush.bf16.msra.mxu0 %v756
    %1213 = vmatpush.bf16.msra.mxu0 %v748
    %1214 = vmatpush.bf16.msra.mxu0 %v740
    %1215 = vmatpush.bf16.msra.mxu0 %v732
    %1216 = vmatpush.bf16.msra.mxu0 %v724
    %1217 = vmatmul.bf16.gmra.mxu0 %v194
    %v1218 = vpop.f32.mrf.mxu0
    %v1219 = vadd.f32 %v1206, %v1218
    %v1220 = vpop.f32.mrf.mxu0
    %1221 = vdwg.mxu0
    %1222 = vmatpush.bf16.msra.mxu0 0
    %1223 = vmatpush.bf16.msra.mxu0 0
    %1224 = vmatpush.bf16.msra.mxu0 0
    %1225 = vmatpush.bf16.msra.mxu0 0
    %1226 = vmatpush.bf16.msra.mxu0 0
    %1227 = vmatpush.bf16.msra.mxu0 %v804
    %1228 = vmatpush.bf16.msra.mxu0 %v796
    %1229 = vmatpush.bf16.msra.mxu0 %v788
    %1230 = vmatmul.bf16.gmra.mxu0 %v960
    %v1231 = vpop.f32.mrf.mxu0
    %v1232 = vadd.f32 %v1219, %v1231
    %v1233 = vpop.f32.mrf.mxu0
    %1234 = vdwg.mxu0
    %1235 = vmatpush.bf16.msra.mxu0 %v717
    %1236 = vmatpush.bf16.msra.mxu0 %v709
    %1237 = vmatpush.bf16.msra.mxu0 %v701
    %1238 = vmatpush.bf16.msra.mxu0 %v693
    %1239 = vmatpush.bf16.msra.mxu0 %v685
    %1240 = vmatpush.bf16.msra.mxu0 %v677
    %1241 = vmatpush.bf16.msra.mxu0 %v669
    %1242 = vmatpush.bf16.msra.mxu0 %v661
    %1243 = vmatmul.bf16.gmra.mxu0 %v193
    %v1244 = vpop.f32.mrf.mxu0
    %v1245 = vadd.f32 %v179, %v1244
    %v1246 = vpop.f32.mrf.mxu0
    %1247 = vdwg.mxu0
    %1248 = vmatpush.bf16.msra.mxu0 %v781
    %1249 = vmatpush.bf16.msra.mxu0 %v773
    %1250 = vmatpush.bf16.msra.mxu0 %v765
    %1251 = vmatpush.bf16.msra.mxu0 %v757
    %1252 = vmatpush.bf16.msra.mxu0 %v749
    %1253 = vmatpush.bf16.msra.mxu0 %v741
    %1254 = vmatpush.bf16.msra.mxu0 %v733
    %1255 = vmatpush.bf16.msra.mxu0 %v725
    %1256 = vmatmul.bf16.gmra.mxu0 %v194
    %v1257 = vpop.f32.mrf.mxu0
    %v1258 = vadd.f32 %v1245, %v1257
    %v1259 = vpop.f32.mrf.mxu0
    %1260 = vdwg.mxu0
    %1261 = vmatpush.bf16.msra.mxu0 0
    %1262 = vmatpush.bf16.msra.mxu0 0
    %1263 = vmatpush.bf16.msra.mxu0 0
    %1264 = vmatpush.bf16.msra.mxu0 0
    %1265 = vmatpush.bf16.msra.mxu0 0
    %1266 = vmatpush.bf16.msra.mxu0 %v805
    %1267 = vmatpush.bf16.msra.mxu0 %v797
    %1268 = vmatpush.bf16.msra.mxu0 %v789
    %1269 = vmatmul.bf16.gmra.mxu0 %v960
    %v1270 = vpop.f32.mrf.mxu0
    %v1271 = vadd.f32 %v1258, %v1270
    %v1272 = vpop.f32.mrf.mxu0
    %1273 = vdwg.mxu0
    %1274 = vst [vmem:[#allocation2] sm:$0xff] %v998
    %1275 = vst [vmem:[#allocation2 + $0x8] sm:$0xff] %v1037
    %1276 = vst [vmem:[#allocation2 + $0x10] sm:$0xff] %v1076
    %1277 = vst [vmem:[#allocation2 + $0x18] sm:$0xff] %v1115
    %1278 = vst [vmem:[#allocation2 + $0x20] sm:$0xff] %v1154
    %1279 = vst [vmem:[#allocation2 + $0x28] sm:$0xff] %v1193
    %1280 = vst [vmem:[#allocation2 + $0x30] sm:$0xff] %v1232
    %1281 = vst [vmem:[#allocation2 + $0x38] sm:$0xff] %v1271
    // Predicated region
    $region14: #{skipgram_forward.1} parent=1 // pred_check
      _
    $region15: #{skipgram_forward.1} parent=1 // pred_check_branch
      %1283 = sbr.rel (0) target = $region17
    $region16: #{skipgram_forward.1} parent=1 // pred_region
      %1285 = vsyncadd [#allocation3], 0
      %s1287 = sshll.u32 [#allocation2], 4
      %s1288 = int_to_ptr.vmem [resolvable:$true] %s1287
      %s1289 = sshll.u32 %s3, 4
      %s1290 = int_to_ptr.hbm [resolvable:$true] %s1289
      %1292 = dma.vmem_to_hbm [thread:$0]  %s1288, 1024, %s1290, [#allocation3]
    $region17: #{skipgram_forward.1} parent=1 // pred_fallthru
      _
    // Predicated region
    $region18: #{skipgram_forward.1} parent=1 // pred_check
      _
    $region19: #{skipgram_forward.1} parent=1 // pred_check_branch
      %1294 = sbr.rel (0) target = $region21
    $region20: #{skipgram_forward.1} parent=1 // pred_region
      %1296 = dma.done [#allocation3], 1024
    $region21: #{skipgram_forward.1} parent=1 // pred_fallthru
      _
    %1297 = vsyncpa [#allocation3], 1

</llo_original>
